<compile_context>
chip_gen: v6e
topology: v6e:2x2x1
jax: 0.10.0
libtpu: 0.0.40
codegen_flags: <defaults>
</compile_context>

<pallas_src>
import functools

import jax
import jax.numpy as jnp
from jax.experimental import pallas as pl
from jax.experimental.pallas import tpu as pltpu


# --------------------------------------------------------------------------
# Kernel: single invocation, all tasks / experts / layers fused
# --------------------------------------------------------------------------
def _make_hea_kernel(num_layers, num_share, num_spcf, task_num):
    num_experts = num_share + num_spcf

    def kernel(*refs):
        x_ref = refs[0]
        sh_refs = refs[1:1 + 2 * num_layers]                     # shared W,b per layer
        sp_refs = refs[1 + 2 * num_layers:1 + 4 * num_layers]    # per-task W,b per layer
        out_ref = refs[-1]

        T, B, D_in = x_ref.shape
        x = x_ref[...].astype(jnp.float32)                       # (T, B, D_in)

        # ---- shared experts: ONE wide matmul per layer over all T*B rows ----
        h_sh = x.reshape(T * B, D_in)
        for l in range(num_layers):
            w = sh_refs[2 * l][...].astype(jnp.float32)          # (d_in, S*d_out)
            b = sh_refs[2 * l + 1][...]                          # (1,    S*d_out)
            h_sh = jnp.maximum(
                jnp.dot(h_sh, w, preferred_element_type=jnp.float32) + b, 0.0)
        d_out = h_sh.shape[-1] // num_share                      # per-expert width

        # ---- per-task: specific experts (+ folded gate) and expert mix ------
        outs = []
        for t in range(task_num):
            x_t = x[t]                                           # (B, D_in)

            # layer 0: specific experts with the gate folded into last E cols
            w0 = sp_refs[0][t].astype(jnp.float32)               # (D_in, P*H0 + E)
            b0 = sp_refs[1][t]                                   # (1,    P*H0 + E)
            z = jnp.dot(x_t, w0, preferred_element_type=jnp.float32) + b0
            split = z.shape[-1] - num_experts
            logits = z[:, split:]                                # (B, E) pre-ReLU
            h_sp = jnp.maximum(z[:, :split], 0.0)

            for l in range(1, num_layers):
                w = sp_refs[2 * l][t].astype(jnp.float32)        # block-diag slab
                b = sp_refs[2 * l + 1][t]
                h_sp = jnp.maximum(
                    jnp.dot(h_sp, w, preferred_element_type=jnp.float32) + b, 0.0)

            # softmax gate over experts
            logits = logits - jnp.max(logits, axis=-1, keepdims=True)
            eg = jnp.exp(logits)
            gates = eg / jnp.sum(eg, axis=-1, keepdims=True)     # (B, E)

            # gate-weighted mix (vectorized; order = [share..., spcf...])
            h_sh_t = h_sh[t * B:(t + 1) * B, :]                  # (B, S*d_out)
            h_all = jnp.concatenate([h_sh_t, h_sp], axis=1)      # (B, E*d_out)
            weighted = h_all.reshape(B, num_experts, d_out) * gates[:, :, None]
            outs.append(jnp.sum(weighted, axis=1))               # (B, d_out)

        # single lane-dense store of the whole result slab
        out_ref[...] = jnp.concatenate(outs, axis=1).astype(out_ref.dtype)

    return kernel


# --------------------------------------------------------------------------
# Wrapper: one grid-less pallas_call for the whole HEA forward
# --------------------------------------------------------------------------
def hea_forward(x_stack, share_ws, share_bs, spcf_ws, spcf_bs,
                *, num_share, num_spcf):
    """x_stack: (T, B, D_in).
    share_ws[l]/share_bs[l]: shared-expert slab for layer l (passed once).
    spcf_ws[l]/spcf_bs[l]:   (T, ...) per-task specific slabs; layer 0 has the
                             gate Linear's E columns appended.
    Returns (B, T*D_out); task t's output is out[:, t*D_out:(t+1)*D_out]."""
    T, B, D_in = x_stack.shape
    L = len(share_ws)
    E = num_share + num_spcf
    D_out = share_ws[-1].shape[-1] // num_share

    inputs = [x_stack]
    for w, b in zip(share_ws, share_bs):
        inputs += [w, b]
    for w, b in zip(spcf_ws, spcf_bs):
        inputs += [w, b]

    # Advisory cost estimate for XLA scheduling around the custom call.
    flops = 2 * T * B * E * D_out                                # expert mix
    for w in share_ws:
        flops += 2 * (T * B) * int(w.shape[0]) * int(w.shape[1])
    for w in spcf_ws:
        flops += 2 * B * int(w.shape[0]) * int(w.shape[1]) * int(w.shape[2])
    transcendentals = T * B * E                                  # softmax exps
    bytes_accessed = (sum(int(a.size) * a.dtype.itemsize for a in inputs)
                      + B * T * D_out * 4)

    vmem_spec = pl.BlockSpec(memory_space=pltpu.MemorySpace.VMEM)
    return pl.pallas_call(
        _make_hea_kernel(L, num_share, num_spcf, T),
        out_shape=jax.ShapeDtypeStruct((B, T * D_out), jnp.float32),
        in_specs=[vmem_spec] * len(inputs),
        out_specs=vmem_spec,
        compiler_params=pltpu.CompilerParams(vmem_limit_bytes=32 * 1024 * 1024),
        cost_estimate=pl.CostEstimate(flops=flops,
                                      transcendentals=transcendentals,
                                      bytes_accessed=bytes_accessed),
    )(*inputs)


# --------------------------------------------------------------------------
# Parameter fusion (done once, plain XLA, outside the kernel)
# --------------------------------------------------------------------------
def fuse_hea_params(gate_params, share_params, spcf_params):
    """Build the kernel-layout parameters.

    gate_params : list over tasks of (W:(D_in,E), b:(E,))
    share_params: list over S share experts of [(W,b), ...] per MLP layer
    spcf_params : list over tasks of list over P specific experts of layers

    Shared-expert slabs are NOT duplicated per task.  Expert order per task is
    [share_0..share_{S-1}, spcf_0..spcf_{P-1}], matching
    torch.cat([share_experts, spcf_experts], dim=2); the gate Linear's E output
    columns are appended to the task-specific layer-0 slab.
    """
    T = len(spcf_params)
    S = len(share_params)
    P = len(spcf_params[0])
    L = len(share_params[0])

    share_ws, share_bs = [], []
    for l in range(L):
        ws = [share_params[s][l][0] for s in range(S)]
        bs = [share_params[s][l][1] for s in range(S)]
        w = (jnp.concatenate(ws, axis=1) if l == 0
             else jax.scipy.linalg.block_diag(*ws))              # O((S*H)^2) for l>0
        share_ws.append(w)
        share_bs.append(jnp.concatenate(bs, axis=0)[None, :])

    spcf_ws, spcf_bs = [], []
    for l in range(L):
        ws_t, bs_t = [], []
        for t in range(T):
            ws = [spcf_params[t][p][l][0] for p in range(P)]
            bs = [spcf_params[t][p][l][1] for p in range(P)]
            if l == 0:
                gw, gb = gate_params[t]
                w = jnp.concatenate(ws + [gw], axis=1)           # (D_in, P*H0 + E)
                b = jnp.concatenate(bs + [gb], axis=0)[None, :]
            else:
                w = jax.scipy.linalg.block_diag(*ws)             # O((P*H)^2)
                b = jnp.concatenate(bs, axis=0)[None, :]
            ws_t.append(w)
            bs_t.append(b)
        spcf_ws.append(jnp.stack(ws_t, axis=0))                  # (T, d_in, width)
        spcf_bs.append(jnp.stack(bs_t, axis=0))                  # (T, 1,    width)
    return share_ws, share_bs, spcf_ws, spcf_bs


# --------------------------------------------------------------------------
# Pure-JAX reference mirroring the PyTorch HEA.forward semantics (eval mode)
# --------------------------------------------------------------------------
def hea_reference(x_list, gate_params, share_params, spcf_params):
    T = len(x_list)

    def mlp(x, layers):
        for w, b in layers:
            x = jnp.maximum(x @ w + b, 0.0)
        return x

    gates = jnp.stack([x_list[t] @ gw + gb
                       for t, (gw, gb) in enumerate(gate_params)], axis=1)  # (B,T,E)
    gates = jax.nn.softmax(gates, axis=-1)[:, :, None, :]                   # (B,T,1,E)
    cat_x = jnp.stack(x_list, axis=1)                                       # (B,T,D)
    share = jnp.stack([mlp(cat_x, layers) for layers in share_params], axis=2)
    spcf = jnp.stack([jnp.stack([mlp(x_list[t], layers)
                                 for layers in spcf_params[t]], axis=1)
                      for t in range(T)], axis=1)
    experts = jnp.concatenate([share, spcf], axis=2)                        # (B,T,E,Do)
    mix = jnp.squeeze(jnp.matmul(gates, experts), axis=2)                   # (B,T,Do)
    return [mix[:, t] for t in range(T)]


# --------------------------------------------------------------------------
# Demo / self-test
# --------------------------------------------------------------------------
if __name__ == "__main__":
    # ple_arch = (share_expt_num=2, spcf_expt_num=2, expt_arch=[32,16], task_num=2)
    # inp_dim = 32, batch = 8, dropout ignored (inference).
    B = 8
    inp_dim = 32
    expt_arch = [32, 16]
    share_expt_num, spcf_expt_num, task_num = 2, 2, 2
    E = share_expt_num + spcf_expt_num

    key = jax.random.PRNGKey(0)
    keys = jax.random.split(key, 64)
    kit = iter(keys)

    def init_linear(k, d_in, d_out):
        kw, kb = jax.random.split(k)
        scale = 1.0 / jnp.sqrt(jnp.float32(d_in))
        w = jax.random.uniform(kw, (d_in, d_out), jnp.float32, -scale, scale)
        b = jax.random.uniform(kb, (d_out,), jnp.float32, -scale, scale)
        return (w, b)

    def init_mlp(k, d_in, arch):
        layers = []
        for d_out in arch:
            k, kl = jax.random.split(k)
            layers.append(init_linear(kl, d_in, d_out))
            d_in = d_out
        return layers

    x_list = [jax.random.normal(next(kit), (B, inp_dim), jnp.float32)
              for _ in range(task_num)]
    gate_params = [init_linear(next(kit), inp_dim, E) for _ in range(task_num)]
    share_params = [init_mlp(next(kit), inp_dim, expt_arch)
                    for _ in range(share_expt_num)]
    spcf_params = [[init_mlp(next(kit), inp_dim, expt_arch)
                    for _ in range(spcf_expt_num)]
                   for _ in range(task_num)]

    share_ws, share_bs, spcf_ws, spcf_bs = fuse_hea_params(
        gate_params, share_params, spcf_params)
    x_stack = jnp.stack(x_list, axis=0)                       # (T, B, D_in)

    fwd = jax.jit(functools.partial(hea_forward,
                                    num_share=share_expt_num,
                                    num_spcf=spcf_expt_num))
    out = fwd(x_stack, share_ws, share_bs, spcf_ws, spcf_bs)
    out = jax.block_until_ready(out)

    D_out = expt_arch[-1]
    ref = hea_reference(x_list, gate_params, share_params, spcf_params)
    assert out.shape == (B, task_num * D_out), out.shape
    for t in range(task_num):
        out_t = out[:, t * D_out:(t + 1) * D_out]
        err = float(jnp.max(jnp.abs(out_t - ref[t])))
        assert jnp.allclose(out_t, ref[t], atol=1e-3, rtol=1e-3), (t, err)

    print("KERNEL_OK")
</pallas_src>

<mosaic_0001>
module attributes {stable_mosaic.version = 11 : i64} {
  func.func @kernel(%arg0: memref<2x8x32xf32, #tpu.memory_space<vmem>>, %arg1: memref<32x64xf32, #tpu.memory_space<vmem>>, %arg2: memref<1x64xf32, #tpu.memory_space<vmem>>, %arg3: memref<64x32xf32, #tpu.memory_space<vmem>>, %arg4: memref<1x32xf32, #tpu.memory_space<vmem>>, %arg5: memref<2x32x68xf32, #tpu.memory_space<vmem>>, %arg6: memref<2x1x68xf32, #tpu.memory_space<vmem>>, %arg7: memref<2x64x32xf32, #tpu.memory_space<vmem>>, %arg8: memref<2x1x32xf32, #tpu.memory_space<vmem>>, %arg9: memref<8x32xf32, #tpu.memory_space<vmem>>) attributes {dimension_semantics = [], scalar_prefetch = 0 : i64, scratch_operands = 0 : i64, tpu.core_type = #tpu.core_type<tc>} {
    %c0 = arith.constant 0 : index
    %c0_0 = arith.constant 0 : index
    %c0_1 = arith.constant 0 : index
    %0 = vector.load %arg0[%c0, %c0_0, %c0_1] : memref<2x8x32xf32, #tpu.memory_space<vmem>>, vector<2x8x32xf32>
    %1 = vector.shape_cast %0 : vector<2x8x32xf32> to vector<16x32xf32>
    %c0_2 = arith.constant 0 : index
    %c0_3 = arith.constant 0 : index
    %2 = vector.load %arg1[%c0_2, %c0_3] : memref<32x64xf32, #tpu.memory_space<vmem>>, vector<32x64xf32>
    %c0_4 = arith.constant 0 : index
    %c0_5 = arith.constant 0 : index
    %3 = vector.load %arg2[%c0_4, %c0_5] : memref<1x64xf32, #tpu.memory_space<vmem>>, vector<1x64xf32>
    %cst = arith.constant dense<0.000000e+00> : vector<16x64xf32>
    %4 = tpu.matmul %1, %2, %cst {dimension_numbers = #tpu.dot_dimension_numbers<[1], [0], [0], [1], [0, 0, 1, 1], [], []>} : vector<16x32xf32>, vector<32x64xf32>, vector<16x64xf32> -> vector<16x64xf32>
    %5 = vector.broadcast %3 : vector<1x64xf32> to vector<16x64xf32>
    %6 = arith.addf %4, %5 : vector<16x64xf32>
    %cst_6 = arith.constant 0.000000e+00 : f32
    %7 = vector.broadcast %cst_6 : f32 to vector<16x64xf32>
    %8 = arith.maximumf %6, %7 : vector<16x64xf32>
    %c0_7 = arith.constant 0 : index
    %c0_8 = arith.constant 0 : index
    %9 = vector.load %arg3[%c0_7, %c0_8] : memref<64x32xf32, #tpu.memory_space<vmem>>, vector<64x32xf32>
    %c0_9 = arith.constant 0 : index
    %c0_10 = arith.constant 0 : index
    %10 = vector.load %arg4[%c0_9, %c0_10] : memref<1x32xf32, #tpu.memory_space<vmem>>, vector<1x32xf32>
    %cst_11 = arith.constant dense<0.000000e+00> : vector<16x32xf32>
    %11 = tpu.matmul %8, %9, %cst_11 {dimension_numbers = #tpu.dot_dimension_numbers<[1], [0], [0], [1], [0, 0, 1, 1], [], []>} : vector<16x64xf32>, vector<64x32xf32>, vector<16x32xf32> -> vector<16x32xf32>
    %12 = vector.broadcast %10 : vector<1x32xf32> to vector<16x32xf32>
    %13 = arith.addf %11, %12 : vector<16x32xf32>
    %cst_12 = arith.constant 0.000000e+00 : f32
    %14 = vector.broadcast %cst_12 : f32 to vector<16x32xf32>
    %15 = arith.maximumf %13, %14 : vector<16x32xf32>
    %16 = vector.extract_strided_slice %0 {offsets = [0, 0, 0], sizes = [1, 8, 32], strides = [1, 1, 1]} : vector<2x8x32xf32> to vector<1x8x32xf32>
    %17 = vector.shape_cast %16 : vector<1x8x32xf32> to vector<8x32xf32>
    %c0_13 = arith.constant 0 : index
    %c0_14 = arith.constant 0 : index
    %c0_15 = arith.constant 0 : index
    %18 = vector.load %arg5[%c0_13, %c0_14, %c0_15] : memref<2x32x68xf32, #tpu.memory_space<vmem>>, vector<1x32x68xf32>
    %19 = vector.shape_cast %18 : vector<1x32x68xf32> to vector<32x68xf32>
    %c0_16 = arith.constant 0 : index
    %c0_17 = arith.constant 0 : index
    %c0_18 = arith.constant 0 : index
    %20 = vector.load %arg6[%c0_16, %c0_17, %c0_18] : memref<2x1x68xf32, #tpu.memory_space<vmem>>, vector<1x1x68xf32>
    %21 = vector.shape_cast %20 : vector<1x1x68xf32> to vector<1x68xf32>
    %cst_19 = arith.constant dense<0.000000e+00> : vector<8x68xf32>
    %22 = tpu.matmul %17, %19, %cst_19 {dimension_numbers = #tpu.dot_dimension_numbers<[1], [0], [0], [1], [0, 0, 1, 1], [], []>} : vector<8x32xf32>, vector<32x68xf32>, vector<8x68xf32> -> vector<8x68xf32>
    %23 = vector.broadcast %21 : vector<1x68xf32> to vector<8x68xf32>
    %24 = arith.addf %22, %23 : vector<8x68xf32>
    %25 = vector.extract_strided_slice %24 {offsets = [0, 64], sizes = [8, 4], strides = [1, 1]} : vector<8x68xf32> to vector<8x4xf32>
    %26 = vector.extract_strided_slice %24 {offsets = [0, 0], sizes = [8, 64], strides = [1, 1]} : vector<8x68xf32> to vector<8x64xf32>
    %cst_20 = arith.constant 0.000000e+00 : f32
    %27 = vector.broadcast %cst_20 : f32 to vector<8x64xf32>
    %28 = arith.maximumf %26, %27 : vector<8x64xf32>
    %c0_21 = arith.constant 0 : index
    %c0_22 = arith.constant 0 : index
    %c0_23 = arith.constant 0 : index
    %29 = vector.load %arg7[%c0_21, %c0_22, %c0_23] : memref<2x64x32xf32, #tpu.memory_space<vmem>>, vector<1x64x32xf32>
    %30 = vector.shape_cast %29 : vector<1x64x32xf32> to vector<64x32xf32>
    %c0_24 = arith.constant 0 : index
    %c0_25 = arith.constant 0 : index
    %c0_26 = arith.constant 0 : index
    %31 = vector.load %arg8[%c0_24, %c0_25, %c0_26] : memref<2x1x32xf32, #tpu.memory_space<vmem>>, vector<1x1x32xf32>
    %32 = vector.shape_cast %31 : vector<1x1x32xf32> to vector<1x32xf32>
    %cst_27 = arith.constant dense<0.000000e+00> : vector<8x32xf32>
    %33 = tpu.matmul %28, %30, %cst_27 {dimension_numbers = #tpu.dot_dimension_numbers<[1], [0], [0], [1], [0, 0, 1, 1], [], []>} : vector<8x64xf32>, vector<64x32xf32>, vector<8x32xf32> -> vector<8x32xf32>
    %34 = vector.broadcast %32 : vector<1x32xf32> to vector<8x32xf32>
    %35 = arith.addf %33, %34 : vector<8x32xf32>
    %cst_28 = arith.constant 0.000000e+00 : f32
    %36 = vector.broadcast %cst_28 : f32 to vector<8x32xf32>
    %37 = arith.maximumf %35, %36 : vector<8x32xf32>
    %cst_29 = arith.constant dense<0xFF800000> : vector<8xf32>
    %38 = vector.multi_reduction <maximumf>, %25, %cst_29 [1] : vector<8x4xf32> to vector<8xf32>
    %39 = vector.shape_cast %38 : vector<8xf32> to vector<8x1xf32>
    %40 = vector.broadcast %39 : vector<8x1xf32> to vector<8x4xf32>
    %41 = arith.subf %25, %40 : vector<8x4xf32>
    %42 = math.exp %41 : vector<8x4xf32>
    %cst_30 = arith.constant dense<0.000000e+00> : vector<8xf32>
    %43 = vector.multi_reduction <add>, %42, %cst_30 [1] : vector<8x4xf32> to vector<8xf32>
    %44 = vector.shape_cast %43 : vector<8xf32> to vector<8x1xf32>
    %45 = vector.broadcast %44 : vector<8x1xf32> to vector<8x4xf32>
    %46 = arith.divf %42, %45 : vector<8x4xf32>
    %47 = vector.extract_strided_slice %15 {offsets = [0, 0], sizes = [8, 32], strides = [1, 1]} : vector<16x32xf32> to vector<8x32xf32>
    %48 = tpu.concatenate %47, %37 in 1 : vector<8x32xf32>, vector<8x32xf32> -> vector<8x64xf32>
    %49 = vector.shape_cast %48 : vector<8x64xf32> to vector<8x4x16xf32>
    %50 = vector.shape_cast %46 : vector<8x4xf32> to vector<8x4x1xf32>
    %51 = vector.broadcast %50 : vector<8x4x1xf32> to vector<8x4x16xf32>
    %52 = arith.mulf %49, %51 : vector<8x4x16xf32>
    %cst_31 = arith.constant dense<0.000000e+00> : vector<8x16xf32>
    %53 = vector.multi_reduction <add>, %52, %cst_31 [1] : vector<8x4x16xf32> to vector<8x16xf32>
    %54 = vector.extract_strided_slice %0 {offsets = [1, 0, 0], sizes = [1, 8, 32], strides = [1, 1, 1]} : vector<2x8x32xf32> to vector<1x8x32xf32>
    %55 = vector.shape_cast %54 : vector<1x8x32xf32> to vector<8x32xf32>
    %c1 = arith.constant 1 : index
    %c0_32 = arith.constant 0 : index
    %c0_33 = arith.constant 0 : index
    %56 = vector.load %arg5[%c1, %c0_32, %c0_33] : memref<2x32x68xf32, #tpu.memory_space<vmem>>, vector<1x32x68xf32>
    %57 = vector.shape_cast %56 : vector<1x32x68xf32> to vector<32x68xf32>
    %c1_34 = arith.constant 1 : index
    %c0_35 = arith.constant 0 : index
    %c0_36 = arith.constant 0 : index
    %58 = vector.load %arg6[%c1_34, %c0_35, %c0_36] : memref<2x1x68xf32, #tpu.memory_space<vmem>>, vector<1x1x68xf32>
    %59 = vector.shape_cast %58 : vector<1x1x68xf32> to vector<1x68xf32>
    %cst_37 = arith.constant dense<0.000000e+00> : vector<8x68xf32>
    %60 = tpu.matmul %55, %57, %cst_37 {dimension_numbers = #tpu.dot_dimension_numbers<[1], [0], [0], [1], [0, 0, 1, 1], [], []>} : vector<8x32xf32>, vector<32x68xf32>, vector<8x68xf32> -> vector<8x68xf32>
    %61 = vector.broadcast %59 : vector<1x68xf32> to vector<8x68xf32>
    %62 = arith.addf %60, %61 : vector<8x68xf32>
    %63 = vector.extract_strided_slice %62 {offsets = [0, 64], sizes = [8, 4], strides = [1, 1]} : vector<8x68xf32> to vector<8x4xf32>
    %64 = vector.extract_strided_slice %62 {offsets = [0, 0], sizes = [8, 64], strides = [1, 1]} : vector<8x68xf32> to vector<8x64xf32>
    %cst_38 = arith.constant 0.000000e+00 : f32
    %65 = vector.broadcast %cst_38 : f32 to vector<8x64xf32>
    %66 = arith.maximumf %64, %65 : vector<8x64xf32>
    %c1_39 = arith.constant 1 : index
    %c0_40 = arith.constant 0 : index
    %c0_41 = arith.constant 0 : index
    %67 = vector.load %arg7[%c1_39, %c0_40, %c0_41] : memref<2x64x32xf32, #tpu.memory_space<vmem>>, vector<1x64x32xf32>
    %68 = vector.shape_cast %67 : vector<1x64x32xf32> to vector<64x32xf32>
    %c1_42 = arith.constant 1 : index
    %c0_43 = arith.constant 0 : index
    %c0_44 = arith.constant 0 : index
    %69 = vector.load %arg8[%c1_42, %c0_43, %c0_44] : memref<2x1x32xf32, #tpu.memory_space<vmem>>, vector<1x1x32xf32>
    %70 = vector.shape_cast %69 : vector<1x1x32xf32> to vector<1x32xf32>
    %cst_45 = arith.constant dense<0.000000e+00> : vector<8x32xf32>
    %71 = tpu.matmul %66, %68, %cst_45 {dimension_numbers = #tpu.dot_dimension_numbers<[1], [0], [0], [1], [0, 0, 1, 1], [], []>} : vector<8x64xf32>, vector<64x32xf32>, vector<8x32xf32> -> vector<8x32xf32>
    %72 = vector.broadcast %70 : vector<1x32xf32> to vector<8x32xf32>
    %73 = arith.addf %71, %72 : vector<8x32xf32>
    %cst_46 = arith.constant 0.000000e+00 : f32
    %74 = vector.broadcast %cst_46 : f32 to vector<8x32xf32>
    %75 = arith.maximumf %73, %74 : vector<8x32xf32>
    %cst_47 = arith.constant dense<0xFF800000> : vector<8xf32>
    %76 = vector.multi_reduction <maximumf>, %63, %cst_47 [1] : vector<8x4xf32> to vector<8xf32>
    %77 = vector.shape_cast %76 : vector<8xf32> to vector<8x1xf32>
    %78 = vector.broadcast %77 : vector<8x1xf32> to vector<8x4xf32>
    %79 = arith.subf %63, %78 : vector<8x4xf32>
    %80 = math.exp %79 : vector<8x4xf32>
    %cst_48 = arith.constant dense<0.000000e+00> : vector<8xf32>
    %81 = vector.multi_reduction <add>, %80, %cst_48 [1] : vector<8x4xf32> to vector<8xf32>
    %82 = vector.shape_cast %81 : vector<8xf32> to vector<8x1xf32>
    %83 = vector.broadcast %82 : vector<8x1xf32> to vector<8x4xf32>
    %84 = arith.divf %80, %83 : vector<8x4xf32>
    %85 = vector.extract_strided_slice %15 {offsets = [8, 0], sizes = [8, 32], strides = [1, 1]} : vector<16x32xf32> to vector<8x32xf32>
    %86 = tpu.concatenate %85, %75 in 1 : vector<8x32xf32>, vector<8x32xf32> -> vector<8x64xf32>
    %87 = vector.shape_cast %86 : vector<8x64xf32> to vector<8x4x16xf32>
    %88 = vector.shape_cast %84 : vector<8x4xf32> to vector<8x4x1xf32>
    %89 = vector.broadcast %88 : vector<8x4x1xf32> to vector<8x4x16xf32>
    %90 = arith.mulf %87, %89 : vector<8x4x16xf32>
    %cst_49 = arith.constant dense<0.000000e+00> : vector<8x16xf32>
    %91 = vector.multi_reduction <add>, %90, %cst_49 [1] : vector<8x4x16xf32> to vector<8x16xf32>
    %92 = tpu.concatenate %53, %91 in 1 : vector<8x16xf32>, vector<8x16xf32> -> vector<8x32xf32>
    %c0_50 = arith.constant 0 : index
    %c0_51 = arith.constant 0 : index
    %93 = vector.load %arg9[%c0_50, %c0_51] : memref<8x32xf32, #tpu.memory_space<vmem>>, vector<8x32xf32>
    tpu.vector_store %arg9[%c0_50, %c0_51], %92 {strides = array<i32>} : memref<8x32xf32, #tpu.memory_space<vmem>>, vector<8x32xf32>,
    return
  }
}

</mosaic_0001>

<llo_original>
// kernel: hea_forward.1
$region0: #{hea_forward.1}
  #allocation0 [shape = 'u32[]', space=smem, size = 0x4, offset = 0x4, fixed_abs, tag = 'smem constant byte address 0x4 - core index']
  #allocation1 [shape = 'u32[144,128]{1,0:T(1,128)}', space=vmem, size = 0x12000, scoped, tag = 'internal scratch']
  %s0 = inlined_call_operand.vmem [shape: f32[2,8,32], index: 0, kind: input, shape index: {}]
  %s1 = inlined_call_operand.vmem [shape: f32[32,64], index: 1, kind: input, shape index: {}]
  %s2 = inlined_call_operand.vmem [shape: f32[1,64], index: 2, kind: input, shape index: {}]
  %s3 = inlined_call_operand.vmem [shape: f32[64,32], index: 3, kind: input, shape index: {}]
  %s4 = inlined_call_operand.vmem [shape: f32[1,32], index: 4, kind: input, shape index: {}]
  %s5 = inlined_call_operand.vmem [shape: f32[2,32,68], index: 5, kind: input, shape index: {}]
  %s6 = inlined_call_operand.vmem [shape: f32[2,1,68], index: 6, kind: input, shape index: {}]
  %s7 = inlined_call_operand.vmem [shape: f32[2,64,32], index: 7, kind: input, shape index: {}]
  %s8 = inlined_call_operand.vmem [shape: f32[2,1,32], index: 8, kind: input, shape index: {}]
  %s9 = inlined_call_operand.hbm [shape: f32[8,32], index: 9, kind: output, shape index: {}]
  %s10 = sld [smem:[#allocation0]]
  $region46: #{hea_forward.1} parent=0
    _
  %s12 = ssub.s32 1, %s10
  %s13 = scalar_select 0, %s12, %s10
  $region1: #{hea_forward.1} parent=0
    #allocation2 [shape = 'u8[4096]{0}', space=vmem, size = 0x1000, scoped, tag = 'output window, operand 0, single buffered']
    #allocation3 [shape = 's32[1]{0}', space=sflag, size = 0x4, scoped, tag = 'scoped memory for hea_forward.1']
    %14 = vsyncpa [#allocation3], 0
    // Predicated region
    $region2: #{hea_forward.1} parent=1 // pred_check
      _
    $region3: #{hea_forward.1} parent=1 // pred_check_branch
      %16 = sbr.rel (0) target = $region5
    $region4: #{hea_forward.1} parent=1 // pred_region
      _
    $region5: #{hea_forward.1} parent=1 // pred_fallthru
      _
    // Predicated region
    $region6: #{hea_forward.1} parent=1 // pred_check
      _
    $region7: #{hea_forward.1} parent=1 // pred_check_branch
      %18 = sbr.rel (0) target = $region9
    $region8: #{hea_forward.1} parent=1 // pred_region
      _
    $region9: #{hea_forward.1} parent=1 // pred_fallthru
      _
    // Predicated region
    $region10: #{hea_forward.1} parent=1 // pred_check
      _
    $region11: #{hea_forward.1} parent=1 // pred_check_branch
      %20 = sbr.rel (0) target = $region13
    $region12: #{hea_forward.1} parent=1 // pred_region
      _
    $region13: #{hea_forward.1} parent=1 // pred_fallthru
      _
    // Predicated region
    $region14: #{hea_forward.1} parent=1 // pred_check
      _
    $region15: #{hea_forward.1} parent=1 // pred_check_branch
      %22 = sbr.rel (0) target = $region17
    $region16: #{hea_forward.1} parent=1 // pred_region
      _
    $region17: #{hea_forward.1} parent=1 // pred_fallthru
      _
    // Predicated region
    $region18: #{hea_forward.1} parent=1 // pred_check
      _
    $region19: #{hea_forward.1} parent=1 // pred_check_branch
      %24 = sbr.rel (0) target = $region21
    $region20: #{hea_forward.1} parent=1 // pred_region
      _
    $region21: #{hea_forward.1} parent=1 // pred_fallthru
      _
    // Predicated region
    $region22: #{hea_forward.1} parent=1 // pred_check
      _
    $region23: #{hea_forward.1} parent=1 // pred_check_branch
      %26 = sbr.rel (0) target = $region25
    $region24: #{hea_forward.1} parent=1 // pred_region
      _
    $region25: #{hea_forward.1} parent=1 // pred_fallthru
      _
    // Predicated region
    $region26: #{hea_forward.1} parent=1 // pred_check
      _
    $region27: #{hea_forward.1} parent=1 // pred_check_branch
      %28 = sbr.rel (0) target = $region29
    $region28: #{hea_forward.1} parent=1 // pred_region
      _
    $region29: #{hea_forward.1} parent=1 // pred_fallthru
      _
    // Predicated region
    $region30: #{hea_forward.1} parent=1 // pred_check
      _
    $region31: #{hea_forward.1} parent=1 // pred_check_branch
      %30 = sbr.rel (0) target = $region33
    $region32: #{hea_forward.1} parent=1 // pred_region
      _
    $region33: #{hea_forward.1} parent=1 // pred_fallthru
      _
    // Predicated region
    $region34: #{hea_forward.1} parent=1 // pred_check
      _
    $region35: #{hea_forward.1} parent=1 // pred_check_branch
      %32 = sbr.rel (0) target = $region37
    $region36: #{hea_forward.1} parent=1 // pred_region
      _
    $region37: #{hea_forward.1} parent=1 // pred_fallthru
      _
    %v33 = vld [vmem:[%s0] sm:$0xff]
    %v34 = vld [vmem:[%s0 + $0x8] sm:$0xff]
    %v35 = vld [vmem:[%s1] sm:$0xff]
    %v36 = vld [vmem:[%s1 + $0x8] sm:$0xff]
    %v37 = vld [vmem:[%s1 + $0x10] sm:$0xff]
    %v38 = vld [vmem:[%s1 + $0x18] sm:$0xff]
    %v39 = vld [vmem:[%s2] sm:$0x1]
    %v41 = vlaneseq
    %v42 = vshrl.u32 %v41, 7
    %v43 = vsub.s32 0, %v42
    %v44 = vrot.slane %v39, %v43
    %vm46 = vcmask 261120
    %v48 = vsel %vm46, %v33, 0
    %v51 = vsel %vm46, %v34, 0
    %53 = vmatprep.subr.mxu0 0.0
    %54 = vmatpush1.msra.mxu0 0.0
    %55 = vmatprep.subr.mxu0 0.0
    %56 = vmatpush1.msra.mxu0 0.0
    %57 = vmatprep.subr.mxu0 0.0
    %58 = vmatpush1.msra.mxu0 0.0
    %59 = vmatprep.subr.mxu0 0.0
    %60 = vmatpush1.msra.mxu0 0.0
    %61 = vmatprep.subr.mxu0 0.0
    %62 = vmatpush1.msra.mxu0 0.0
    %63 = vmatprep.subr.mxu0 0.0
    %64 = vmatpush1.msra.mxu0 0.0
    %65 = vmatprep.subr.mxu0 0.0
    %66 = vmatpush1.msra.mxu0 0.0
    %67 = vmatprep.subr.mxu0 0.0
    %68 = vmatpush1.msra.mxu0 0.0
    %69 = vmatprep.subr.mxu0 0.0
    %70 = vmatpush1.msra.mxu0 0.0
    %71 = vmatprep.subr.mxu0 0.0
    %72 = vmatpush1.msra.mxu0 0.0
    %73 = vmatprep.subr.mxu0 0.0
    %74 = vmatpush1.msra.mxu0 0.0
    %75 = vmatprep.subr.mxu0 0.0
    %76 = vmatpush1.msra.mxu0 0.0
    %77 = vmatprep.subr.mxu0 0.0
    %78 = vmatpush1.msra.mxu0 %v38
    %79 = vmatprep.subr.mxu0 0.0
    %80 = vmatpush1.msra.mxu0 %v37
    %81 = vmatprep.subr.mxu0 0.0
    %82 = vmatpush1.msra.mxu0 %v36
    %83 = vmatprep.subr.mxu0 0.0
    %84 = vmatpush1.msra.mxu0 %v35
    %85 = vmatprep.subr.mxu0 0.0
    %86 = vmatpush2.msra.mxu0 0.0
    %87 = vmatprep.subr.mxu0 0.0
    %88 = vmatpush2.msra.mxu0 0.0
    %89 = vmatprep.subr.mxu0 0.0
    %90 = vmatpush2.msra.mxu0 0.0
    %91 = vmatprep.subr.mxu0 0.0
    %92 = vmatpush2.msra.mxu0 0.0
    %93 = vmatprep.subr.mxu0 0.0
    %94 = vmatpush2.msra.mxu0 0.0
    %95 = vmatprep.subr.mxu0 0.0
    %96 = vmatpush2.msra.mxu0 0.0
    %97 = vmatprep.subr.mxu0 0.0
    %98 = vmatpush2.msra.mxu0 0.0
    %99 = vmatprep.subr.mxu0 0.0
    %100 = vmatpush2.msra.mxu0 0.0
    %101 = vmatprep.subr.mxu0 0.0
    %102 = vmatpush2.msra.mxu0 0.0
    %103 = vmatprep.subr.mxu0 0.0
    %104 = vmatpush2.msra.mxu0 0.0
    %105 = vmatprep.subr.mxu0 0.0
    %106 = vmatpush2.msra.mxu0 0.0
    %107 = vmatprep.subr.mxu0 0.0
    %108 = vmatpush2.msra.mxu0 0.0
    %109 = vmatprep.subr.mxu0 0.0
    %110 = vmatpush2.msra.mxu0 0.0
    %111 = vmatprep.subr.mxu0 0.0
    %112 = vmatpush2.msra.mxu0 0.0
    %113 = vmatprep.subr.mxu0 0.0
    %114 = vmatpush2.msra.mxu0 0.0
    %115 = vmatprep.subr.mxu0 0.0
    %116 = vmatpush2.msra.mxu0 0.0
    %117 = vmatprep.mubr.f32.mxu0 0.0
    %118 = vmatmul.mubr.f32.gmra.mxu0 %v48
    %v119 = vpop.f32.mrf.mxu0
    %v120 = vadd.f32 %v44, %v119
    %v121 = vpop.f32.mrf.mxu0
    %122 = vmatprep.mubr.f32.mxu0 0.0
    %123 = vmatmul.mubr.f32.gmra.mxu0 %v51
    %v124 = vpop.f32.mrf.mxu0
    %v125 = vadd.f32 %v44, %v124
    %v126 = vpop.f32.mrf.mxu0
    %127 = vdwg.mxu0
    %v128 = vmax.f32 %v120, 0.0
    %v129 = vmax.f32 %v125, 0.0
    %v130 = vld [vmem:[%s3] sm:$0xff]
    %v131 = vld [vmem:[%s3 + $0x8] sm:$0xff]
    %v132 = vld [vmem:[%s3 + $0x10] sm:$0xff]
    %v133 = vld [vmem:[%s3 + $0x18] sm:$0xff]
    %v134 = vld [vmem:[%s3 + $0x20] sm:$0xff]
    %v135 = vld [vmem:[%s3 + $0x28] sm:$0xff]
    %v136 = vld [vmem:[%s3 + $0x30] sm:$0xff]
    %v137 = vld [vmem:[%s3 + $0x38] sm:$0xff]
    %v138 = vld [vmem:[%s4] sm:$0x1]
    %v140 = vlaneseq
    %v141 = vshrl.u32 %v140, 7
    %v142 = vsub.s32 0, %v141
    %v143 = vrot.slane %v138, %v142
    %vm145 = vcmask 523264
    %v147 = vsel %vm145, %v128, 0
    %v150 = vsel %vm145, %v129, 0
    %152 = vmatprep.subr.mxu0 0.0
    %153 = vmatpush1.msra.mxu0 0.0
    %154 = vmatprep.subr.mxu0 0.0
    %155 = vmatpush1.msra.mxu0 0.0
    %156 = vmatprep.subr.mxu0 0.0
    %157 = vmatpush1.msra.mxu0 0.0
    %158 = vmatprep.subr.mxu0 0.0
    %159 = vmatpush1.msra.mxu0 0.0
    %160 = vmatprep.subr.mxu0 0.0
    %161 = vmatpush1.msra.mxu0 0.0
    %162 = vmatprep.subr.mxu0 0.0
    %163 = vmatpush1.msra.mxu0 0.0
    %164 = vmatprep.subr.mxu0 0.0
    %165 = vmatpush1.msra.mxu0 0.0
    %166 = vmatprep.subr.mxu0 0.0
    %167 = vmatpush1.msra.mxu0 0.0
    %168 = vmatprep.subr.mxu0 0.0
    %169 = vmatpush1.msra.mxu0 %v137
    %170 = vmatprep.subr.mxu0 0.0
    %171 = vmatpush1.msra.mxu0 %v136
    %172 = vmatprep.subr.mxu0 0.0
    %173 = vmatpush1.msra.mxu0 %v135
    %174 = vmatprep.subr.mxu0 0.0
    %175 = vmatpush1.msra.mxu0 %v134
    %176 = vmatprep.subr.mxu0 0.0
    %177 = vmatpush1.msra.mxu0 %v133
    %178 = vmatprep.subr.mxu0 0.0
    %179 = vmatpush1.msra.mxu0 %v132
    %180 = vmatprep.subr.mxu0 0.0
    %181 = vmatpush1.msra.mxu0 %v131
    %182 = vmatprep.subr.mxu0 0.0
    %183 = vmatpush1.msra.mxu0 %v130
    %184 = vmatprep.subr.mxu0 0.0
    %185 = vmatpush2.msra.mxu0 0.0
    %186 = vmatprep.subr.mxu0 0.0
    %187 = vmatpush2.msra.mxu0 0.0
    %188 = vmatprep.subr.mxu0 0.0
    %189 = vmatpush2.msra.mxu0 0.0
    %190 = vmatprep.subr.mxu0 0.0
    %191 = vmatpush2.msra.mxu0 0.0
    %192 = vmatprep.subr.mxu0 0.0
    %193 = vmatpush2.msra.mxu0 0.0
    %194 = vmatprep.subr.mxu0 0.0
    %195 = vmatpush2.msra.mxu0 0.0
    %196 = vmatprep.subr.mxu0 0.0
    %197 = vmatpush2.msra.mxu0 0.0
    %198 = vmatprep.subr.mxu0 0.0
    %199 = vmatpush2.msra.mxu0 0.0
    %200 = vmatprep.subr.mxu0 0.0
    %201 = vmatpush2.msra.mxu0 0.0
    %202 = vmatprep.subr.mxu0 0.0
    %203 = vmatpush2.msra.mxu0 0.0
    %204 = vmatprep.subr.mxu0 0.0
    %205 = vmatpush2.msra.mxu0 0.0
    %206 = vmatprep.subr.mxu0 0.0
    %207 = vmatpush2.msra.mxu0 0.0
    %208 = vmatprep.subr.mxu0 0.0
    %209 = vmatpush2.msra.mxu0 0.0
    %210 = vmatprep.subr.mxu0 0.0
    %211 = vmatpush2.msra.mxu0 0.0
    %212 = vmatprep.subr.mxu0 0.0
    %213 = vmatpush2.msra.mxu0 0.0
    %214 = vmatprep.subr.mxu0 0.0
    %215 = vmatpush2.msra.mxu0 0.0
    %216 = vmatprep.mubr.f32.mxu0 0.0
    %217 = vmatmul.mubr.f32.gmra.mxu0 %v147
    %v218 = vpop.f32.mrf.mxu0
    %v219 = vadd.f32 %v143, %v218
    %v220 = vpop.f32.mrf.mxu0
    %221 = vmatprep.mubr.f32.mxu0 0.0
    %222 = vmatmul.mubr.f32.gmra.mxu0 %v150
    %v223 = vpop.f32.mrf.mxu0
    %v224 = vadd.f32 %v143, %v223
    %v225 = vpop.f32.mrf.mxu0
    %226 = vdwg.mxu0
    %v227 = vmax.f32 %v219, 0.0
    %v228 = vmax.f32 %v224, 0.0
    %v229 = vld [vmem:[%s5] sm:$0xff]
    %v230 = vld [vmem:[%s5 + $0x8] sm:$0xff]
    %v231 = vld [vmem:[%s5 + $0x10] sm:$0xff]
    %v232 = vld [vmem:[%s5 + $0x18] sm:$0xff]
    %v233 = vld [vmem:[%s6] sm:$0x1]
    %v235 = vlaneseq
    %v236 = vshrl.u32 %v235, 7
    %v237 = vsub.s32 0, %v236
    %v238 = vrot.slane %v233, %v237
    %240 = vmatprep.subr.mxu0 0.0
    %241 = vmatpush1.msra.mxu0 0.0
    %242 = vmatprep.subr.mxu0 0.0
    %243 = vmatpush1.msra.mxu0 0.0
    %244 = vmatprep.subr.mxu0 0.0
    %245 = vmatpush1.msra.mxu0 0.0
    %246 = vmatprep.subr.mxu0 0.0
    %247 = vmatpush1.msra.mxu0 0.0
    %248 = vmatprep.subr.mxu0 0.0
    %249 = vmatpush1.msra.mxu0 0.0
    %250 = vmatprep.subr.mxu0 0.0
    %251 = vmatpush1.msra.mxu0 0.0
    %252 = vmatprep.subr.mxu0 0.0
    %253 = vmatpush1.msra.mxu0 0.0
    %254 = vmatprep.subr.mxu0 0.0
    %255 = vmatpush1.msra.mxu0 0.0
    %256 = vmatprep.subr.mxu0 0.0
    %257 = vmatpush1.msra.mxu0 0.0
    %258 = vmatprep.subr.mxu0 0.0
    %259 = vmatpush1.msra.mxu0 0.0
    %260 = vmatprep.subr.mxu0 0.0
    %261 = vmatpush1.msra.mxu0 0.0
    %262 = vmatprep.subr.mxu0 0.0
    %263 = vmatpush1.msra.mxu0 0.0
    %264 = vmatprep.subr.mxu0 0.0
    %265 = vmatpush1.msra.mxu0 %v232
    %266 = vmatprep.subr.mxu0 0.0
    %267 = vmatpush1.msra.mxu0 %v231
    %268 = vmatprep.subr.mxu0 0.0
    %269 = vmatpush1.msra.mxu0 %v230
    %270 = vmatprep.subr.mxu0 0.0
    %271 = vmatpush1.msra.mxu0 %v229
    %272 = vmatprep.subr.mxu0 0.0
    %273 = vmatpush2.msra.mxu0 0.0
    %274 = vmatprep.subr.mxu0 0.0
    %275 = vmatpush2.msra.mxu0 0.0
    %276 = vmatprep.subr.mxu0 0.0
    %277 = vmatpush2.msra.mxu0 0.0
    %278 = vmatprep.subr.mxu0 0.0
    %279 = vmatpush2.msra.mxu0 0.0
    %280 = vmatprep.subr.mxu0 0.0
    %281 = vmatpush2.msra.mxu0 0.0
    %282 = vmatprep.subr.mxu0 0.0
    %283 = vmatpush2.msra.mxu0 0.0
    %284 = vmatprep.subr.mxu0 0.0
    %285 = vmatpush2.msra.mxu0 0.0
    %286 = vmatprep.subr.mxu0 0.0
    %287 = vmatpush2.msra.mxu0 0.0
    %288 = vmatprep.subr.mxu0 0.0
    %289 = vmatpush2.msra.mxu0 0.0
    %290 = vmatprep.subr.mxu0 0.0
    %291 = vmatpush2.msra.mxu0 0.0
    %292 = vmatprep.subr.mxu0 0.0
    %293 = vmatpush2.msra.mxu0 0.0
    %294 = vmatprep.subr.mxu0 0.0
    %295 = vmatpush2.msra.mxu0 0.0
    %296 = vmatprep.subr.mxu0 0.0
    %297 = vmatpush2.msra.mxu0 0.0
    %298 = vmatprep.subr.mxu0 0.0
    %299 = vmatpush2.msra.mxu0 0.0
    %300 = vmatprep.subr.mxu0 0.0
    %301 = vmatpush2.msra.mxu0 0.0
    %302 = vmatprep.subr.mxu0 0.0
    %303 = vmatpush2.msra.mxu0 0.0
    %304 = vmatprep.mubr.f32.mxu0 0.0
    %305 = vmatmul.mubr.f32.gmra.mxu0 %v48
    %v306 = vpop.f32.mrf.mxu0
    %v307 = vadd.f32 %v238, %v306
    %v308 = vpop.f32.mrf.mxu0
    %309 = vdwg.mxu0
    %v310 = vmax.f32 %v307, 0.0
    %v311 = vld [vmem:[%s7] sm:$0xff]
    %v312 = vld [vmem:[%s7 + $0x8] sm:$0xff]
    %v313 = vld [vmem:[%s7 + $0x10] sm:$0xff]
    %v314 = vld [vmem:[%s7 + $0x18] sm:$0xff]
    %v315 = vld [vmem:[%s7 + $0x20] sm:$0xff]
    %v316 = vld [vmem:[%s7 + $0x28] sm:$0xff]
    %v317 = vld [vmem:[%s7 + $0x30] sm:$0xff]
    %v318 = vld [vmem:[%s7 + $0x38] sm:$0xff]
    %v319 = vld [vmem:[%s8] sm:$0x1]
    %v321 = vlaneseq
    %v322 = vshrl.u32 %v321, 7
    %v323 = vsub.s32 0, %v322
    %v324 = vrot.slane %v319, %v323
    %v327 = vsel %vm145, %v310, 0
    %329 = vmatprep.subr.mxu0 0.0
    %330 = vmatpush1.msra.mxu0 0.0
    %331 = vmatprep.subr.mxu0 0.0
    %332 = vmatpush1.msra.mxu0 0.0
    %333 = vmatprep.subr.mxu0 0.0
    %334 = vmatpush1.msra.mxu0 0.0
    %335 = vmatprep.subr.mxu0 0.0
    %336 = vmatpush1.msra.mxu0 0.0
    %337 = vmatprep.subr.mxu0 0.0
    %338 = vmatpush1.msra.mxu0 0.0
    %339 = vmatprep.subr.mxu0 0.0
    %340 = vmatpush1.msra.mxu0 0.0
    %341 = vmatprep.subr.mxu0 0.0
    %342 = vmatpush1.msra.mxu0 0.0
    %343 = vmatprep.subr.mxu0 0.0
    %344 = vmatpush1.msra.mxu0 0.0
    %345 = vmatprep.subr.mxu0 0.0
    %346 = vmatpush1.msra.mxu0 %v318
    %347 = vmatprep.subr.mxu0 0.0
    %348 = vmatpush1.msra.mxu0 %v317
    %349 = vmatprep.subr.mxu0 0.0
    %350 = vmatpush1.msra.mxu0 %v316
    %351 = vmatprep.subr.mxu0 0.0
    %352 = vmatpush1.msra.mxu0 %v315
    %353 = vmatprep.subr.mxu0 0.0
    %354 = vmatpush1.msra.mxu0 %v314
    %355 = vmatprep.subr.mxu0 0.0
    %356 = vmatpush1.msra.mxu0 %v313
    %357 = vmatprep.subr.mxu0 0.0
    %358 = vmatpush1.msra.mxu0 %v312
    %359 = vmatprep.subr.mxu0 0.0
    %360 = vmatpush1.msra.mxu0 %v311
    %361 = vmatprep.subr.mxu0 0.0
    %362 = vmatpush2.msra.mxu0 0.0
    %363 = vmatprep.subr.mxu0 0.0
    %364 = vmatpush2.msra.mxu0 0.0
    %365 = vmatprep.subr.mxu0 0.0
    %366 = vmatpush2.msra.mxu0 0.0
    %367 = vmatprep.subr.mxu0 0.0
    %368 = vmatpush2.msra.mxu0 0.0
    %369 = vmatprep.subr.mxu0 0.0
    %370 = vmatpush2.msra.mxu0 0.0
    %371 = vmatprep.subr.mxu0 0.0
    %372 = vmatpush2.msra.mxu0 0.0
    %373 = vmatprep.subr.mxu0 0.0
    %374 = vmatpush2.msra.mxu0 0.0
    %375 = vmatprep.subr.mxu0 0.0
    %376 = vmatpush2.msra.mxu0 0.0
    %377 = vmatprep.subr.mxu0 0.0
    %378 = vmatpush2.msra.mxu0 0.0
    %379 = vmatprep.subr.mxu0 0.0
    %380 = vmatpush2.msra.mxu0 0.0
    %381 = vmatprep.subr.mxu0 0.0
    %382 = vmatpush2.msra.mxu0 0.0
    %383 = vmatprep.subr.mxu0 0.0
    %384 = vmatpush2.msra.mxu0 0.0
    %385 = vmatprep.subr.mxu0 0.0
    %386 = vmatpush2.msra.mxu0 0.0
    %387 = vmatprep.subr.mxu0 0.0
    %388 = vmatpush2.msra.mxu0 0.0
    %389 = vmatprep.subr.mxu0 0.0
    %390 = vmatpush2.msra.mxu0 0.0
    %391 = vmatprep.subr.mxu0 0.0
    %392 = vmatpush2.msra.mxu0 0.0
    %393 = vmatprep.mubr.f32.mxu0 0.0
    %394 = vmatmul.mubr.f32.gmra.mxu0 %v327
    %v395 = vpop.f32.mrf.mxu0
    %v396 = vadd.f32 %v324, %v395
    %v397 = vpop.f32.mrf.mxu0
    %398 = vdwg.mxu0
    %v399 = vmax.f32 %v396, 0.0
    %vm400 = vcmask 556544
    %v401 = vsel %vm400, %v307, -inf
    %402 = vmax.xlane.f32.xlu0 %v401
    %v403 = vpop.xlane.xlu0 %402
    %v404 = vsub.f32 %v307, %v403
    %v405 = vmul.f32 %v404, 1.442695
    %v406 = vpow.pop %v405
    %408 = vrot.lane.b32.xlu0 %v406, 64
    %v409 = vpop.permute.xlu0 %408
    %vm411 = vcmask 31744
    %v412 = vsel %vm411, %v409, 0.0
    %413 = vadd.xlane.f32.xlu0 %v412
    %v414 = vpop.xlane.xlu0 %413
    %v415 = vrcp.pop %v414
    %v416 = vmul.f32 %v406, %v415
    %418 = vrot.lane.b32.xlu0 %v399, 32
    %v419 = vpop.permute.xlu0 %418
    %v421 = vsel %vm46, %v227, %v419
    %423 = vrot.lane.b32.xlu0 %v421, 112
    %v424 = vpop.permute.xlu0 %423
    %426 = vrot.lane.b32.xlu0 %v421, 96
    %v427 = vpop.permute.xlu0 %426
    %429 = vrot.lane.b32.xlu0 %v421, 80
    %v430 = vpop.permute.xlu0 %429
    %v432 = vcombine.low %v421, %v427
    %v433 = vcombine.high %v421, %v427
    %v435 = vunpack.c.l.s4 1983009808
    %v436 = vunpack.c.0.s8 %v435
    %v437 = vlaneseq
    %v438 = vshrl.u32 %v437, 7
    %v439 = vsub.s32 %v436, %v438
    %v440 = vrot.slane %v432, %v439
    %v442 = vunpack.c.l.s4 1983009808
    %v443 = vunpack.c.0.s8 %v442
    %v444 = vlaneseq
    %v445 = vshrl.u32 %v444, 7
    %v446 = vsub.s32 %v443, %v445
    %v447 = vrot.slane %v433, %v446
    %v448 = vcombine.low %v424, %v430
    %v449 = vcombine.high %v424, %v430
    %v451 = vunpack.c.l.s4 1983009808
    %v452 = vunpack.c.0.s8 %v451
    %v453 = vlaneseq
    %v454 = vshrl.u32 %v453, 7
    %v455 = vsub.s32 %v452, %v454
    %v456 = vrot.slane %v448, %v455
    %v458 = vunpack.c.l.s4 1983009808
    %v459 = vunpack.c.0.s8 %v458
    %v460 = vlaneseq
    %v461 = vshrl.u32 %v460, 7
    %v462 = vsub.s32 %v459, %v461
    %v463 = vrot.slane %v449, %v462
    %v464 = vcombine.low %v440, %v456
    %v465 = vcombine.high %v440, %v456
    %v467 = vunpack.c.l.s4 1934713408
    %v468 = vunpack.c.0.s8 %v467
    %v469 = vlaneseq
    %v470 = vshrl.u32 %v469, 7
    %v471 = vsub.s32 %v468, %v470
    %v472 = vrot.slane %v464, %v471
    %v474 = vunpack.c.l.s4 1934713408
    %v475 = vunpack.c.0.s8 %v474
    %v476 = vlaneseq
    %v477 = vshrl.u32 %v476, 7
    %v478 = vsub.s32 %v475, %v477
    %v479 = vrot.slane %v465, %v478
    %v480 = vcombine.low %v447, %v463
    %v481 = vcombine.high %v447, %v463
    %v483 = vunpack.c.l.s4 1934713408
    %v484 = vunpack.c.0.s8 %v483
    %v485 = vlaneseq
    %v486 = vshrl.u32 %v485, 7
    %v487 = vsub.s32 %v484, %v486
    %v488 = vrot.slane %v480, %v487
    %v490 = vunpack.c.l.s4 1934713408
    %v491 = vunpack.c.0.s8 %v490
    %v492 = vlaneseq
    %v493 = vshrl.u32 %v492, 7
    %v494 = vsub.s32 %v491, %v493
    %v495 = vrot.slane %v481, %v494
    %v496 = vcombine.high %v472, 0.0
    %v497 = vcombine.high %v479, 0.0
    %v498 = vcombine.high %v488, 0.0
    %v499 = vcombine.high %v495, 0.0
    %v500 = vlaneseq
    %v501 = vshrl.u32 %v500, 7
    %v502 = vsub.s32 0, %v501
    %v503 = vrot.slane %v416, %v502
    %s505 = sor.u32 256, 64
    %506 = vbcast.lane.b32.xlu0 %v503, %s505
    %v507 = vpop.permute.xlu0 %506
    %v508 = vlaneseq
    %v509 = vshrl.u32 %v508, 7
    %v510 = vsub.s32 1, %v509
    %v511 = vrot.slane %v416, %v510
    %s513 = sor.u32 256, 64
    %514 = vbcast.lane.b32.xlu0 %v511, %s513
    %v515 = vpop.permute.xlu0 %514
    %v516 = vlaneseq
    %v517 = vshrl.u32 %v516, 7
    %v518 = vsub.s32 2, %v517
    %v519 = vrot.slane %v416, %v518
    %s521 = sor.u32 256, 64
    %522 = vbcast.lane.b32.xlu0 %v519, %s521
    %v523 = vpop.permute.xlu0 %522
    %v524 = vlaneseq
    %v525 = vshrl.u32 %v524, 7
    %v526 = vsub.s32 3, %v525
    %v527 = vrot.slane %v416, %v526
    %s529 = sor.u32 256, 64
    %530 = vbcast.lane.b32.xlu0 %v527, %s529
    %v531 = vpop.permute.xlu0 %530
    %v532 = vlaneseq
    %v533 = vshrl.u32 %v532, 7
    %v534 = vsub.s32 4, %v533
    %v535 = vrot.slane %v416, %v534
    %s537 = sor.u32 256, 64
    %538 = vbcast.lane.b32.xlu0 %v535, %s537
    %v539 = vpop.permute.xlu0 %538
    %v540 = vlaneseq
    %v541 = vshrl.u32 %v540, 7
    %v542 = vsub.s32 5, %v541
    %v543 = vrot.slane %v416, %v542
    %s545 = sor.u32 256, 64
    %546 = vbcast.lane.b32.xlu0 %v543, %s545
    %v547 = vpop.permute.xlu0 %546
    %v548 = vlaneseq
    %v549 = vshrl.u32 %v548, 7
    %v550 = vsub.s32 6, %v549
    %v551 = vrot.slane %v416, %v550
    %s553 = sor.u32 256, 64
    %554 = vbcast.lane.b32.xlu0 %v551, %s553
    %v555 = vpop.permute.xlu0 %554
    %v556 = vlaneseq
    %v557 = vshrl.u32 %v556, 7
    %v558 = vsub.s32 7, %v557
    %v559 = vrot.slane %v416, %v558
    %s561 = sor.u32 256, 64
    %562 = vbcast.lane.b32.xlu0 %v559, %s561
    %v563 = vpop.permute.xlu0 %562
    %v564 = vmul.f32 %v472, %v507
    %v565 = vmul.f32 %v496, %v515
    %v566 = vmul.f32 %v479, %v523
    %v567 = vmul.f32 %v497, %v531
    %v568 = vmul.f32 %v488, %v539
    %v569 = vmul.f32 %v498, %v547
    %v570 = vmul.f32 %v495, %v555
    %v571 = vmul.f32 %v499, %v563
    %vm572 = vcmask 125952
    %v573 = vsel %vm572, %v564, 0.0
    %v574 = vrot.slane %v573, 4
    %v575 = vadd.f32 %v573, %v574
    %v576 = vrot.slane %v575, 2
    %v577 = vadd.f32 %v575, %v576
    %v578 = vrot.slane %v577, 1
    %v579 = vadd.f32 %v577, %v578
    %v580 = vsel %vm572, %v565, 0.0
    %v581 = vrot.slane %v580, 4
    %v582 = vadd.f32 %v580, %v581
    %v583 = vrot.slane %v582, 2
    %v584 = vadd.f32 %v582, %v583
    %v585 = vrot.slane %v584, 1
    %v586 = vadd.f32 %v584, %v585
    %v587 = vsel %vm572, %v566, 0.0
    %v588 = vrot.slane %v587, 4
    %v589 = vadd.f32 %v587, %v588
    %v590 = vrot.slane %v589, 2
    %v591 = vadd.f32 %v589, %v590
    %v592 = vrot.slane %v591, 1
    %v593 = vadd.f32 %v591, %v592
    %v594 = vsel %vm572, %v567, 0.0
    %v595 = vrot.slane %v594, 4
    %v596 = vadd.f32 %v594, %v595
    %v597 = vrot.slane %v596, 2
    %v598 = vadd.f32 %v596, %v597
    %v599 = vrot.slane %v598, 1
    %v600 = vadd.f32 %v598, %v599
    %v601 = vsel %vm572, %v568, 0.0
    %v602 = vrot.slane %v601, 4
    %v603 = vadd.f32 %v601, %v602
    %v604 = vrot.slane %v603, 2
    %v605 = vadd.f32 %v603, %v604
    %v606 = vrot.slane %v605, 1
    %v607 = vadd.f32 %v605, %v606
    %v608 = vsel %vm572, %v569, 0.0
    %v609 = vrot.slane %v608, 4
    %v610 = vadd.f32 %v608, %v609
    %v611 = vrot.slane %v610, 2
    %v612 = vadd.f32 %v610, %v611
    %v613 = vrot.slane %v612, 1
    %v614 = vadd.f32 %v612, %v613
    %v615 = vsel %vm572, %v570, 0.0
    %v616 = vrot.slane %v615, 4
    %v617 = vadd.f32 %v615, %v616
    %v618 = vrot.slane %v617, 2
    %v619 = vadd.f32 %v617, %v618
    %v620 = vrot.slane %v619, 1
    %v621 = vadd.f32 %v619, %v620
    %v622 = vsel %vm572, %v571, 0.0
    %v623 = vrot.slane %v622, 4
    %v624 = vadd.f32 %v622, %v623
    %v625 = vrot.slane %v624, 2
    %v626 = vadd.f32 %v624, %v625
    %v627 = vrot.slane %v626, 1
    %v628 = vadd.f32 %v626, %v627
    %s629 = scalar_lea.vmem %s5, 32
    %v630 = vld [vmem:[%s629] sm:$0xff]
    %v631 = vld [vmem:[%s629 + $0x8] sm:$0xff]
    %v632 = vld [vmem:[%s629 + $0x10] sm:$0xff]
    %v633 = vld [vmem:[%s629 + $0x18] sm:$0xff]
    %s634 = scalar_lea.vmem %s6, 1
    %v635 = vld [vmem:[%s634] sm:$0x1]
    %v637 = vlaneseq
    %v638 = vshrl.u32 %v637, 7
    %v639 = vsub.s32 0, %v638
    %v640 = vrot.slane %v635, %v639
    %642 = vmatprep.subr.mxu0 0.0
    %643 = vmatpush1.msra.mxu0 0.0
    %644 = vmatprep.subr.mxu0 0.0
    %645 = vmatpush1.msra.mxu0 0.0
    %646 = vmatprep.subr.mxu0 0.0
    %647 = vmatpush1.msra.mxu0 0.0
    %648 = vmatprep.subr.mxu0 0.0
    %649 = vmatpush1.msra.mxu0 0.0
    %650 = vmatprep.subr.mxu0 0.0
    %651 = vmatpush1.msra.mxu0 0.0
    %652 = vmatprep.subr.mxu0 0.0
    %653 = vmatpush1.msra.mxu0 0.0
    %654 = vmatprep.subr.mxu0 0.0
    %655 = vmatpush1.msra.mxu0 0.0
    %656 = vmatprep.subr.mxu0 0.0
    %657 = vmatpush1.msra.mxu0 0.0
    %658 = vmatprep.subr.mxu0 0.0
    %659 = vmatpush1.msra.mxu0 0.0
    %660 = vmatprep.subr.mxu0 0.0
    %661 = vmatpush1.msra.mxu0 0.0
    %662 = vmatprep.subr.mxu0 0.0
    %663 = vmatpush1.msra.mxu0 0.0
    %664 = vmatprep.subr.mxu0 0.0
    %665 = vmatpush1.msra.mxu0 0.0
    %666 = vmatprep.subr.mxu0 0.0
    %667 = vmatpush1.msra.mxu0 %v633
    %668 = vmatprep.subr.mxu0 0.0
    %669 = vmatpush1.msra.mxu0 %v632
    %670 = vmatprep.subr.mxu0 0.0
    %671 = vmatpush1.msra.mxu0 %v631
    %672 = vmatprep.subr.mxu0 0.0
    %673 = vmatpush1.msra.mxu0 %v630
    %674 = vmatprep.subr.mxu0 0.0
    %675 = vmatpush2.msra.mxu0 0.0
    %676 = vmatprep.subr.mxu0 0.0
    %677 = vmatpush2.msra.mxu0 0.0
    %678 = vmatprep.subr.mxu0 0.0
    %679 = vmatpush2.msra.mxu0 0.0
    %680 = vmatprep.subr.mxu0 0.0
    %681 = vmatpush2.msra.mxu0 0.0
    %682 = vmatprep.subr.mxu0 0.0
    %683 = vmatpush2.msra.mxu0 0.0
    %684 = vmatprep.subr.mxu0 0.0
    %685 = vmatpush2.msra.mxu0 0.0
    %686 = vmatprep.subr.mxu0 0.0
    %687 = vmatpush2.msra.mxu0 0.0
    %688 = vmatprep.subr.mxu0 0.0
    %689 = vmatpush2.msra.mxu0 0.0
    %690 = vmatprep.subr.mxu0 0.0
    %691 = vmatpush2.msra.mxu0 0.0
    %692 = vmatprep.subr.mxu0 0.0
    %693 = vmatpush2.msra.mxu0 0.0
    %694 = vmatprep.subr.mxu0 0.0
    %695 = vmatpush2.msra.mxu0 0.0
    %696 = vmatprep.subr.mxu0 0.0
    %697 = vmatpush2.msra.mxu0 0.0
    %698 = vmatprep.subr.mxu0 0.0
    %699 = vmatpush2.msra.mxu0 0.0
    %700 = vmatprep.subr.mxu0 0.0
    %701 = vmatpush2.msra.mxu0 0.0
    %702 = vmatprep.subr.mxu0 0.0
    %703 = vmatpush2.msra.mxu0 0.0
    %704 = vmatprep.subr.mxu0 0.0
    %705 = vmatpush2.msra.mxu0 0.0
    %706 = vmatprep.mubr.f32.mxu0 0.0
    %707 = vmatmul.mubr.f32.gmra.mxu0 %v51
    %v708 = vpop.f32.mrf.mxu0
    %v709 = vadd.f32 %v640, %v708
    %v710 = vpop.f32.mrf.mxu0
    %711 = vdwg.mxu0
    %v712 = vmax.f32 %v709, 0.0
    %s713 = scalar_lea.vmem %s7, 64
    %v714 = vld [vmem:[%s713] sm:$0xff]
    %v715 = vld [vmem:[%s713 + $0x8] sm:$0xff]
    %v716 = vld [vmem:[%s713 + $0x10] sm:$0xff]
    %v717 = vld [vmem:[%s713 + $0x18] sm:$0xff]
    %v718 = vld [vmem:[%s713 + $0x20] sm:$0xff]
    %v719 = vld [vmem:[%s713 + $0x28] sm:$0xff]
    %v720 = vld [vmem:[%s713 + $0x30] sm:$0xff]
    %v721 = vld [vmem:[%s713 + $0x38] sm:$0xff]
    %s722 = scalar_lea.vmem %s8, 1
    %v723 = vld [vmem:[%s722] sm:$0x1]
    %v725 = vlaneseq
    %v726 = vshrl.u32 %v725, 7
    %v727 = vsub.s32 0, %v726
    %v728 = vrot.slane %v723, %v727
    %v731 = vsel %vm145, %v712, 0
    %733 = vmatprep.subr.mxu0 0.0
    %734 = vmatpush1.msra.mxu0 0.0
    %735 = vmatprep.subr.mxu0 0.0
    %736 = vmatpush1.msra.mxu0 0.0
    %737 = vmatprep.subr.mxu0 0.0
    %738 = vmatpush1.msra.mxu0 0.0
    %739 = vmatprep.subr.mxu0 0.0
    %740 = vmatpush1.msra.mxu0 0.0
    %741 = vmatprep.subr.mxu0 0.0
    %742 = vmatpush1.msra.mxu0 0.0
    %743 = vmatprep.subr.mxu0 0.0
    %744 = vmatpush1.msra.mxu0 0.0
    %745 = vmatprep.subr.mxu0 0.0
    %746 = vmatpush1.msra.mxu0 0.0
    %747 = vmatprep.subr.mxu0 0.0
    %748 = vmatpush1.msra.mxu0 0.0
    %749 = vmatprep.subr.mxu0 0.0
    %750 = vmatpush1.msra.mxu0 %v721
    %751 = vmatprep.subr.mxu0 0.0
    %752 = vmatpush1.msra.mxu0 %v720
    %753 = vmatprep.subr.mxu0 0.0
    %754 = vmatpush1.msra.mxu0 %v719
    %755 = vmatprep.subr.mxu0 0.0
    %756 = vmatpush1.msra.mxu0 %v718
    %757 = vmatprep.subr.mxu0 0.0
    %758 = vmatpush1.msra.mxu0 %v717
    %759 = vmatprep.subr.mxu0 0.0
    %760 = vmatpush1.msra.mxu0 %v716
    %761 = vmatprep.subr.mxu0 0.0
    %762 = vmatpush1.msra.mxu0 %v715
    %763 = vmatprep.subr.mxu0 0.0
    %764 = vmatpush1.msra.mxu0 %v714
    %765 = vmatprep.subr.mxu0 0.0
    %766 = vmatpush2.msra.mxu0 0.0
    %767 = vmatprep.subr.mxu0 0.0
    %768 = vmatpush2.msra.mxu0 0.0
    %769 = vmatprep.subr.mxu0 0.0
    %770 = vmatpush2.msra.mxu0 0.0
    %771 = vmatprep.subr.mxu0 0.0
    %772 = vmatpush2.msra.mxu0 0.0
    %773 = vmatprep.subr.mxu0 0.0
    %774 = vmatpush2.msra.mxu0 0.0
    %775 = vmatprep.subr.mxu0 0.0
    %776 = vmatpush2.msra.mxu0 0.0
    %777 = vmatprep.subr.mxu0 0.0
    %778 = vmatpush2.msra.mxu0 0.0
    %779 = vmatprep.subr.mxu0 0.0
    %780 = vmatpush2.msra.mxu0 0.0
    %781 = vmatprep.subr.mxu0 0.0
    %782 = vmatpush2.msra.mxu0 0.0
    %783 = vmatprep.subr.mxu0 0.0
    %784 = vmatpush2.msra.mxu0 0.0
    %785 = vmatprep.subr.mxu0 0.0
    %786 = vmatpush2.msra.mxu0 0.0
    %787 = vmatprep.subr.mxu0 0.0
    %788 = vmatpush2.msra.mxu0 0.0
    %789 = vmatprep.subr.mxu0 0.0
    %790 = vmatpush2.msra.mxu0 0.0
    %791 = vmatprep.subr.mxu0 0.0
    %792 = vmatpush2.msra.mxu0 0.0
    %793 = vmatprep.subr.mxu0 0.0
    %794 = vmatpush2.msra.mxu0 0.0
    %795 = vmatprep.subr.mxu0 0.0
    %796 = vmatpush2.msra.mxu0 0.0
    %797 = vmatprep.mubr.f32.mxu0 0.0
    %798 = vmatmul.mubr.f32.gmra.mxu0 %v731
    %v799 = vpop.f32.mrf.mxu0
    %v800 = vadd.f32 %v728, %v799
    %v801 = vpop.f32.mrf.mxu0
    %802 = vdwg.mxu0
    %v803 = vmax.f32 %v800, 0.0
    %v804 = vsel %vm400, %v709, -inf
    %805 = vmax.xlane.f32.xlu0 %v804
    %v806 = vpop.xlane.xlu0 %805
    %v807 = vsub.f32 %v709, %v806
    %v808 = vmul.f32 %v807, 1.442695
    %v809 = vpow.pop %v808
    %811 = vrot.lane.b32.xlu0 %v809, 64
    %v812 = vpop.permute.xlu0 %811
    %v814 = vsel %vm411, %v812, 0.0
    %815 = vadd.xlane.f32.xlu0 %v814
    %v816 = vpop.xlane.xlu0 %815
    %v817 = vrcp.pop %v816
    %v818 = vmul.f32 %v809, %v817
    %820 = vrot.lane.b32.xlu0 %v803, 32
    %v821 = vpop.permute.xlu0 %820
    %v823 = vsel %vm46, %v228, %v821
    %825 = vrot.lane.b32.xlu0 %v823, 112
    %v826 = vpop.permute.xlu0 %825
    %828 = vrot.lane.b32.xlu0 %v823, 96
    %v829 = vpop.permute.xlu0 %828
    %831 = vrot.lane.b32.xlu0 %v823, 80
    %v832 = vpop.permute.xlu0 %831
    %v834 = vcombine.low %v823, %v829
    %v835 = vcombine.high %v823, %v829
    %v837 = vunpack.c.l.s4 1983009808
    %v838 = vunpack.c.0.s8 %v837
    %v839 = vlaneseq
    %v840 = vshrl.u32 %v839, 7
    %v841 = vsub.s32 %v838, %v840
    %v842 = vrot.slane %v834, %v841
    %v844 = vunpack.c.l.s4 1983009808
    %v845 = vunpack.c.0.s8 %v844
    %v846 = vlaneseq
    %v847 = vshrl.u32 %v846, 7
    %v848 = vsub.s32 %v845, %v847
    %v849 = vrot.slane %v835, %v848
    %v850 = vcombine.low %v826, %v832
    %v851 = vcombine.high %v826, %v832
    %v853 = vunpack.c.l.s4 1983009808
    %v854 = vunpack.c.0.s8 %v853
    %v855 = vlaneseq
    %v856 = vshrl.u32 %v855, 7
    %v857 = vsub.s32 %v854, %v856
    %v858 = vrot.slane %v850, %v857
    %v860 = vunpack.c.l.s4 1983009808
    %v861 = vunpack.c.0.s8 %v860
    %v862 = vlaneseq
    %v863 = vshrl.u32 %v862, 7
    %v864 = vsub.s32 %v861, %v863
    %v865 = vrot.slane %v851, %v864
    %v866 = vcombine.low %v842, %v858
    %v867 = vcombine.high %v842, %v858
    %v869 = vunpack.c.l.s4 1934713408
    %v870 = vunpack.c.0.s8 %v869
    %v871 = vlaneseq
    %v872 = vshrl.u32 %v871, 7
    %v873 = vsub.s32 %v870, %v872
    %v874 = vrot.slane %v866, %v873
    %v876 = vunpack.c.l.s4 1934713408
    %v877 = vunpack.c.0.s8 %v876
    %v878 = vlaneseq
    %v879 = vshrl.u32 %v878, 7
    %v880 = vsub.s32 %v877, %v879
    %v881 = vrot.slane %v867, %v880
    %v882 = vcombine.low %v849, %v865
    %v883 = vcombine.high %v849, %v865
    %v885 = vunpack.c.l.s4 1934713408
    %v886 = vunpack.c.0.s8 %v885
    %v887 = vlaneseq
    %v888 = vshrl.u32 %v887, 7
    %v889 = vsub.s32 %v886, %v888
    %v890 = vrot.slane %v882, %v889
    %v892 = vunpack.c.l.s4 1934713408
    %v893 = vunpack.c.0.s8 %v892
    %v894 = vlaneseq
    %v895 = vshrl.u32 %v894, 7
    %v896 = vsub.s32 %v893, %v895
    %v897 = vrot.slane %v883, %v896
    %v898 = vcombine.high %v874, 0.0
    %v899 = vcombine.high %v881, 0.0
    %v900 = vcombine.high %v890, 0.0
    %v901 = vcombine.high %v897, 0.0
    %v902 = vlaneseq
    %v903 = vshrl.u32 %v902, 7
    %v904 = vsub.s32 0, %v903
    %v905 = vrot.slane %v818, %v904
    %s907 = sor.u32 256, 64
    %908 = vbcast.lane.b32.xlu0 %v905, %s907
    %v909 = vpop.permute.xlu0 %908
    %v910 = vlaneseq
    %v911 = vshrl.u32 %v910, 7
    %v912 = vsub.s32 1, %v911
    %v913 = vrot.slane %v818, %v912
    %s915 = sor.u32 256, 64
    %916 = vbcast.lane.b32.xlu0 %v913, %s915
    %v917 = vpop.permute.xlu0 %916
    %v918 = vlaneseq
    %v919 = vshrl.u32 %v918, 7
    %v920 = vsub.s32 2, %v919
    %v921 = vrot.slane %v818, %v920
    %s923 = sor.u32 256, 64
    %924 = vbcast.lane.b32.xlu0 %v921, %s923
    %v925 = vpop.permute.xlu0 %924
    %v926 = vlaneseq
    %v927 = vshrl.u32 %v926, 7
    %v928 = vsub.s32 3, %v927
    %v929 = vrot.slane %v818, %v928
    %s931 = sor.u32 256, 64
    %932 = vbcast.lane.b32.xlu0 %v929, %s931
    %v933 = vpop.permute.xlu0 %932
    %v934 = vlaneseq
    %v935 = vshrl.u32 %v934, 7
    %v936 = vsub.s32 4, %v935
    %v937 = vrot.slane %v818, %v936
    %s939 = sor.u32 256, 64
    %940 = vbcast.lane.b32.xlu0 %v937, %s939
    %v941 = vpop.permute.xlu0 %940
    %v942 = vlaneseq
    %v943 = vshrl.u32 %v942, 7
    %v944 = vsub.s32 5, %v943
    %v945 = vrot.slane %v818, %v944
    %s947 = sor.u32 256, 64
    %948 = vbcast.lane.b32.xlu0 %v945, %s947
    %v949 = vpop.permute.xlu0 %948
    %v950 = vlaneseq
    %v951 = vshrl.u32 %v950, 7
    %v952 = vsub.s32 6, %v951
    %v953 = vrot.slane %v818, %v952
    %s955 = sor.u32 256, 64
    %956 = vbcast.lane.b32.xlu0 %v953, %s955
    %v957 = vpop.permute.xlu0 %956
    %v958 = vlaneseq
    %v959 = vshrl.u32 %v958, 7
    %v960 = vsub.s32 7, %v959
    %v961 = vrot.slane %v818, %v960
    %s963 = sor.u32 256, 64
    %964 = vbcast.lane.b32.xlu0 %v961, %s963
    %v965 = vpop.permute.xlu0 %964
    %v966 = vmul.f32 %v874, %v909
    %v967 = vmul.f32 %v898, %v917
    %v968 = vmul.f32 %v881, %v925
    %v969 = vmul.f32 %v899, %v933
    %v970 = vmul.f32 %v890, %v941
    %v971 = vmul.f32 %v900, %v949
    %v972 = vmul.f32 %v897, %v957
    %v973 = vmul.f32 %v901, %v965
    %v974 = vsel %vm572, %v966, 0.0
    %v975 = vrot.slane %v974, 4
    %v976 = vadd.f32 %v974, %v975
    %v977 = vrot.slane %v976, 2
    %v978 = vadd.f32 %v976, %v977
    %v979 = vrot.slane %v978, 1
    %v980 = vadd.f32 %v978, %v979
    %v981 = vsel %vm572, %v967, 0.0
    %v982 = vrot.slane %v981, 4
    %v983 = vadd.f32 %v981, %v982
    %v984 = vrot.slane %v983, 2
    %v985 = vadd.f32 %v983, %v984
    %v986 = vrot.slane %v985, 1
    %v987 = vadd.f32 %v985, %v986
    %v988 = vsel %vm572, %v968, 0.0
    %v989 = vrot.slane %v988, 4
    %v990 = vadd.f32 %v988, %v989
    %v991 = vrot.slane %v990, 2
    %v992 = vadd.f32 %v990, %v991
    %v993 = vrot.slane %v992, 1
    %v994 = vadd.f32 %v992, %v993
    %v995 = vsel %vm572, %v969, 0.0
    %v996 = vrot.slane %v995, 4
    %v997 = vadd.f32 %v995, %v996
    %v998 = vrot.slane %v997, 2
    %v999 = vadd.f32 %v997, %v998
    %v1000 = vrot.slane %v999, 1
    %v1001 = vadd.f32 %v999, %v1000
    %v1002 = vsel %vm572, %v970, 0.0
    %v1003 = vrot.slane %v1002, 4
    %v1004 = vadd.f32 %v1002, %v1003
    %v1005 = vrot.slane %v1004, 2
    %v1006 = vadd.f32 %v1004, %v1005
    %v1007 = vrot.slane %v1006, 1
    %v1008 = vadd.f32 %v1006, %v1007
    %v1009 = vsel %vm572, %v971, 0.0
    %v1010 = vrot.slane %v1009, 4
    %v1011 = vadd.f32 %v1009, %v1010
    %v1012 = vrot.slane %v1011, 2
    %v1013 = vadd.f32 %v1011, %v1012
    %v1014 = vrot.slane %v1013, 1
    %v1015 = vadd.f32 %v1013, %v1014
    %v1016 = vsel %vm572, %v972, 0.0
    %v1017 = vrot.slane %v1016, 4
    %v1018 = vadd.f32 %v1016, %v1017
    %v1019 = vrot.slane %v1018, 2
    %v1020 = vadd.f32 %v1018, %v1019
    %v1021 = vrot.slane %v1020, 1
    %v1022 = vadd.f32 %v1020, %v1021
    %v1023 = vsel %vm572, %v973, 0.0
    %v1024 = vrot.slane %v1023, 4
    %v1025 = vadd.f32 %v1023, %v1024
    %v1026 = vrot.slane %v1025, 2
    %v1027 = vadd.f32 %v1025, %v1026
    %v1028 = vrot.slane %v1027, 1
    %v1029 = vadd.f32 %v1027, %v1028
    %vm1038 = vcmask 1041409
    %v1039 = vsel %vm1038, %v586, %v579
    %vm1040 = vcmask 1042434
    %v1041 = vsel %vm1040, %v593, %v1039
    %vm1042 = vcmask 1043459
    %v1043 = vsel %vm1042, %v600, %v1041
    %vm1044 = vcmask 1044484
    %v1045 = vsel %vm1044, %v607, %v1043
    %vm1046 = vcmask 1045509
    %v1047 = vsel %vm1046, %v614, %v1045
    %vm1048 = vcmask 1046534
    %v1049 = vsel %vm1048, %v621, %v1047
    %vm1050 = vcmask 1047559
    %v1051 = vsel %vm1050, %v628, %v1049
    %v1061 = vsel %vm1038, %v987, %v980
    %v1062 = vsel %vm1040, %v994, %v1061
    %v1063 = vsel %vm1042, %v1001, %v1062
    %v1064 = vsel %vm1044, %v1008, %v1063
    %v1065 = vsel %vm1046, %v1015, %v1064
    %v1066 = vsel %vm1048, %v1022, %v1065
    %v1067 = vsel %vm1050, %v1029, %v1066
    %1068 = vrot.lane.b32.xlu0 %v1067, 16
    %v1069 = vpop.permute.xlu0 %1068
    %vm1071 = vcmask 130048
    %v1072 = vsel %vm1071, %v1051, %v1069
    %1073 = vst.msk [vmem:[#allocation2] sm:$0xff] %vm46, %v1072
    // Predicated region
    $region38: #{hea_forward.1} parent=1 // pred_check
      _
    $region39: #{hea_forward.1} parent=1 // pred_check_branch
      %1075 = sbr.rel (0) target = $region41
    $region40: #{hea_forward.1} parent=1 // pred_region
      %s1077 = ssub.s32 128, 128
      %1078 = vsyncadd [#allocation3], %s1077
      %s1080 = sshll.u32 [#allocation2], 4
      %s1081 = int_to_ptr.vmem [resolvable:$true] %s1080
      %1083 = dma.vmem_to_hbm [thread:$0]  %s1081, 128, %s9, [#allocation3]
    $region41: #{hea_forward.1} parent=1 // pred_fallthru
      _
    // Predicated region
    $region42: #{hea_forward.1} parent=1 // pred_check
      _
    $region43: #{hea_forward.1} parent=1 // pred_check_branch
      %1085 = sbr.rel (0) target = $region45
    $region44: #{hea_forward.1} parent=1 // pred_region
      %1086 = dma.done [#allocation3], 128
    $region45: #{hea_forward.1} parent=1 // pred_fallthru
      _
    %1087 = vsyncpa [#allocation3], 1

</llo_original>
